<compile_context>
chip_gen: v7x
topology: tpu7x:2x2x1
jax: 0.10.0
libtpu: 0.0.40
codegen_flags: <defaults>
</compile_context>

<pallas_src>
import functools

import jax
import jax.numpy as jnp
from jax.experimental import pallas as pl
from jax.experimental.pallas import tpu as pltpu


def _hyper_channel_kernel(x_ref, wt_ref, b_ref, o_ref, *, inv_hw):
    # x_ref : (bt, C, HW)  sub-batch, channels on sublanes, spatial on lanes
    # wt_ref: (C, C)       hyper-net weight, already transposed (W_h^T), f32
    # b_ref : (1, C)       hyper-net bias as a lane-oriented row, f32
    # o_ref : (bt, C, HW)
    x = x_ref[...]                                            # native dtype

    # Global average pool over the spatial (lane) dim.  Accumulate in f32
    # without materializing an f32 copy of the whole block.
    z = jnp.sum(x, axis=-1, dtype=jnp.float32) * inv_hw       # (bt, C) f32

    # Hyper-kernel generation: 1x1 conv over channels == (bt,C)@(C,C) on MXU.
    h = jnp.dot(z, wt_ref[...], preferred_element_type=jnp.float32)
    h = h + b_ref[...]                                        # broadcast over bt

    # Z.Z.W: hyper-kernel (.) context, then sigmoid gate (EUP, f32).
    gate = jax.nn.sigmoid(h * z)                              # (bt, C) f32

    # Channel-wise re-weighting of the input, in the I/O dtype.
    o_ref[...] = (x * gate.astype(x.dtype)[:, :, None]).astype(o_ref.dtype)


def _vmem_limit_bytes():
    """Scoped-VMEM limit: ~3/4 of physical VMEM, generation-aware."""
    cap = None
    try:
        info = pltpu.get_tpu_info()
        cap = getattr(info, "vmem_capacity_bytes", None)
    except Exception:
        cap = None
    if not cap:
        cap = 64 * 1024 * 1024  # conservative fallback (v7x per-TC VMEM)
    limit = int(cap) * 3 // 4
    # Clamp to a sane range: >= 32 MiB, <= 96 MiB (v5e/v6e headroom).
    return max(32 * 1024 * 1024, min(limit, 96 * 1024 * 1024))


def _pick_batch_tile(B, C, HW, x_itemsize, vmem_limit_bytes):
    """Largest divisor of B whose block fits the VMEM budget.

    Live VMEM per grid step (conservative accounting):
      x in block  : bt*C*HW*itemsize, double-buffered (x2)
      out block   : bt*C*HW*itemsize, double-buffered (x2)
      weight      : C*C*4, double-buffered (x2)
      bias + f32 temporaries (z, h, gate): ~ (C + 3*bt*C) * 4
    """
    fixed = 2 * C * C * 4 + 2 * C * 4
    budget = int(vmem_limit_bytes * 0.9) - fixed
    per_row = 4 * C * HW * x_itemsize + 3 * C * 4
    max_bt = max(1, budget // max(per_row, 1))

    # Keep >= 2 grid steps whenever B >= 2 so both v7x TensorCores are fed;
    # on single-TC chips (v5e/v6e) one extra ~0.35 us step is negligible.
    cap = max(1, B // 2) if B >= 2 else B
    max_bt = min(max_bt, cap, B)

    # Largest divisor of B <= max_bt -> grid tiles B exactly (no batch pad,
    # no reliance on OOB-write masking for a ragged last block).
    bt = 1
    for d in range(1, max_bt + 1):
        if B % d == 0:
            bt = d
    return bt


def hyper_channel_interaction(x_nchw, w_h, b_h):
    """x_nchw: (B, C, H, W); w_h: (C, C) 1x1-conv weight; b_h: (C,) bias."""
    B, C, H, W = x_nchw.shape
    HW = H * W
    out_dtype = x_nchw.dtype

    # Contiguous reshape only -- no padding, no extra HBM pass.
    x = x_nchw.reshape(B, C, HW)

    # Pre-transpose the tiny (C, C) weight in the wrapper so the kernel runs
    # z @ W^T directly on the MXU (no in-kernel XLU transpose); bias as a
    # lane-oriented (1, C) row.  Both are negligible next to x.
    w_t = w_h.astype(jnp.float32).T
    b_row = b_h.astype(jnp.float32).reshape(1, C)

    vmem_limit = _vmem_limit_bytes()
    bt = _pick_batch_tile(B, C, HW, x.dtype.itemsize, vmem_limit)
    grid = (B // bt,)

    kernel = functools.partial(_hyper_channel_kernel, inv_hw=1.0 / float(HW))

    cost = pl.CostEstimate(
        flops=2 * B * C * C + 2 * B * C * HW,
        transcendentals=B * C,
        bytes_accessed=2 * B * C * HW * x.dtype.itemsize + C * C * 4 + C * 4,
    )

    out = pl.pallas_call(
        kernel,
        out_shape=jax.ShapeDtypeStruct((B, C, HW), out_dtype),
        grid_spec=pltpu.PrefetchScalarGridSpec(
            num_scalar_prefetch=0,
            grid=grid,
            in_specs=[
                pl.BlockSpec((bt, C, HW), lambda i: (i, 0, 0)),
                pl.BlockSpec((C, C), lambda i: (0, 0)),
                pl.BlockSpec((1, C), lambda i: (0, 0)),
            ],
            out_specs=pl.BlockSpec((bt, C, HW), lambda i: (i, 0, 0)),
        ),
        compiler_params=pltpu.CompilerParams(
            dimension_semantics=("parallel",),
            vmem_limit_bytes=vmem_limit,
        ),
        cost_estimate=cost,
    )(x, w_t, b_row)

    return out.reshape(B, C, H, W)


def _reference(x_nchw, w_h, b_h):
    z = jnp.mean(x_nchw, axis=(2, 3))                         # (B, C)
    h = z @ w_h.T + b_h[None, :]                              # (B, C)
    gate = jax.nn.sigmoid(h * z)                              # (B, C)
    return x_nchw * gate[:, :, None, None]


if __name__ == "__main__":
    B, C, H, W = 2, 4, 16, 16
    key = jax.random.PRNGKey(0)
    kx, kw, kb = jax.random.split(key, 3)
    x = jax.random.normal(kx, (B, C, H, W), dtype=jnp.float32)
    # Deterministic hyper-network params (1x1 conv weight [C, C], bias [C]).
    w_h = jax.random.normal(kw, (C, C), dtype=jnp.float32) * (1.0 / jnp.sqrt(C))
    b_h = jax.random.normal(kb, (C,), dtype=jnp.float32) * 0.1

    out = hyper_channel_interaction(x, w_h, b_h)
    out = jax.block_until_ready(out)

    ref = _reference(x, w_h, b_h)
    assert out.shape == ref.shape, "shape mismatch vs reference"
    assert jnp.allclose(out, ref, atol=1e-5, rtol=1e-5), "mismatch vs reference"
    print("KERNEL_OK")
</pallas_src>

<mosaic_0001>
module attributes {stable_mosaic.version = 11 : i64} {
  func.func @_hyper_channel_kernel(%arg0: i32, %arg1: memref<1x4x256xf32, #tpu.memory_space<vmem>>, %arg2: memref<4x4xf32, #tpu.memory_space<vmem>>, %arg3: memref<1x4xf32, #tpu.memory_space<vmem>>, %arg4: memref<1x4x256xf32, #tpu.memory_space<vmem>>) attributes {dimension_semantics = [#tpu.dimension_semantics<parallel>], iteration_bounds = array<i64: 2>, scalar_prefetch = 0 : i64, scratch_operands = 0 : i64, tpu.core_type = #tpu.core_type<tc>, window_params = [{transform_indices = @transform_0, window_bounds = array<i64: 1, 4, 256>}, {pipeline_mode = #tpu.pipeline_mode<synchronous>, transform_indices = @transform_1, window_bounds = array<i64: 4, 4>}, {pipeline_mode = #tpu.pipeline_mode<synchronous>, transform_indices = @transform_2, window_bounds = array<i64: 1, 4>}, {transform_indices = @transform_3, window_bounds = array<i64: 1, 4, 256>}]} {
    %c0 = arith.constant 0 : index
    %c0_0 = arith.constant 0 : index
    %c0_1 = arith.constant 0 : index
    %0 = vector.load %arg1[%c0, %c0_0, %c0_1] : memref<1x4x256xf32, #tpu.memory_space<vmem>>, vector<1x4x256xf32>
    %cst = arith.constant dense<0.000000e+00> : vector<1x4xf32>
    %1 = vector.multi_reduction <add>, %0, %cst [2] : vector<1x4x256xf32> to vector<1x4xf32>
    %cst_2 = arith.constant 3.906250e-03 : f32
    %2 = vector.broadcast %cst_2 : f32 to vector<1x4xf32>
    %3 = arith.mulf %1, %2 : vector<1x4xf32>
    %c0_3 = arith.constant 0 : index
    %c0_4 = arith.constant 0 : index
    %4 = vector.load %arg2[%c0_3, %c0_4] : memref<4x4xf32, #tpu.memory_space<vmem>>, vector<4x4xf32>
    %cst_5 = arith.constant dense<0.000000e+00> : vector<1x4xf32>
    %5 = tpu.matmul %3, %4, %cst_5 {dimension_numbers = #tpu.dot_dimension_numbers<[1], [0], [0], [1], [0, 0, 1, 1], [], []>} : vector<1x4xf32>, vector<4x4xf32>, vector<1x4xf32> -> vector<1x4xf32>
    %c0_6 = arith.constant 0 : index
    %c0_7 = arith.constant 0 : index
    %6 = vector.load %arg3[%c0_6, %c0_7] : memref<1x4xf32, #tpu.memory_space<vmem>>, vector<1x4xf32>
    %7 = arith.addf %5, %6 : vector<1x4xf32>
    %8 = arith.mulf %7, %3 : vector<1x4xf32>
    %9 = arith.negf %8 : vector<1x4xf32>
    %10 = math.exp %9 : vector<1x4xf32>
    %cst_8 = arith.constant 1.000000e+00 : f32
    %11 = vector.broadcast %cst_8 : f32 to vector<1x4xf32>
    %12 = arith.addf %11, %10 : vector<1x4xf32>
    %13 = arith.divf %11, %12 : vector<1x4xf32>
    %14 = vector.shape_cast %13 : vector<1x4xf32> to vector<1x4x1xf32>
    %15 = vector.broadcast %14 : vector<1x4x1xf32> to vector<1x4x256xf32>
    %16 = arith.mulf %0, %15 : vector<1x4x256xf32>
    %c0_9 = arith.constant 0 : index
    %c0_10 = arith.constant 0 : index
    %c0_11 = arith.constant 0 : index
    %17 = vector.load %arg4[%c0_9, %c0_10, %c0_11] : memref<1x4x256xf32, #tpu.memory_space<vmem>>, vector<1x4x256xf32>
    tpu.vector_store %arg4[%c0_9, %c0_10, %c0_11], %16 {strides = array<i32>} : memref<1x4x256xf32, #tpu.memory_space<vmem>>, vector<1x4x256xf32>,
    return
  }
  func.func @transform_0(%arg0: i32) -> (i32, i32, i32) {
    %c0_i32 = arith.constant 0 : i32
    %c0_i32_0 = arith.constant 0 : i32
    %c0_i32_1 = arith.constant 0 : i32
    return %arg0, %c0_i32, %c0_i32_0 : i32, i32, i32
  }
  func.func @transform_1(%arg0: i32) -> (i32, i32) {
    %c0_i32 = arith.constant 0 : i32
    %c0_i32_0 = arith.constant 0 : i32
    %c0_i32_1 = arith.constant 0 : i32
    return %c0_i32, %c0_i32_0 : i32, i32
  }
  func.func @transform_2(%arg0: i32) -> (i32, i32) {
    %c0_i32 = arith.constant 0 : i32
    %c0_i32_0 = arith.constant 0 : i32
    %c0_i32_1 = arith.constant 0 : i32
    return %c0_i32, %c0_i32_0 : i32, i32
  }
  func.func @transform_3(%arg0: i32) -> (i32, i32, i32) {
    %c0_i32 = arith.constant 0 : i32
    %c0_i32_0 = arith.constant 0 : i32
    %c0_i32_1 = arith.constant 0 : i32
    return %arg0, %c0_i32, %c0_i32_0 : i32, i32, i32
  }
}

</mosaic_0001>

<llo_original>
// kernel: tpu_custom_call.1
$region0: #{tpu_custom_call.1}
  #allocation0 [shape = 'u32[]', space=smem, size = 0x4, offset = 0x4, fixed_abs, tag = 'smem constant byte address 0x4 - core index']
  #allocation1 [shape = 'u32[144,128]{1,0:T(1,128)}', space=vmem, size = 0x12000, scoped, tag = 'internal scratch']
  %s0 = inlined_call_operand.hbm [shape: f32[2,4,256], index: 0, kind: input, shape index: {}]
  %s1 = inlined_call_operand.hbm [shape: f32[4,4], index: 1, kind: input, shape index: {}]
  %s2 = inlined_call_operand.vmem [shape: f32[1,4], index: 2, kind: input, shape index: {}]
  %s3 = inlined_call_operand.hbm [shape: f32[2,4,256], index: 3, kind: output, shape index: {}]
  %s4 = sld [smem:[#allocation0]]
  $region53: #{tpu_custom_call.1} parent=0
    _
  %s6 = ssub.s32 1, %s4
  %s7 = scalar_select 0, %s6, %s4
  $region1: #{tpu_custom_call.1} parent=0
    #allocation2 [shape = 'u8[8192]{0}', space=vmem, size = 0x2000, scoped, tag = 'input window, operand 0']
    #allocation3 [shape = 's32[2]{0}', space=sflag, size = 0x8, scoped, tag = 'scoped memory for tpu_custom_call.1']
    #allocation4 [shape = 's32[2]{0}', space=sflag, size = 0x8, scoped, tag = 'scoped memory for tpu_custom_call.1']
    #allocation5 [shape = 'u8[2048]{0}', space=vmem, size = 0x800, scoped, tag = 'input window, operand 1, single buffered']
    #allocation6 [shape = 's32[1]{0}', space=sflag, size = 0x4, scoped, tag = 'scoped memory for tpu_custom_call.1']
    #allocation7 [shape = 'u8[8192]{0}', space=vmem, size = 0x2000, scoped, tag = 'output window, operand 0']
    %8 = vsyncpa [#allocation3], 0
    %s9 = scalar_lea.sflag [#allocation3], 1
    %10 = vsyncpa %s9, 0
    %11 = vsyncpa [#allocation6], 0
    %12 = vsyncpa [#allocation4], 0
    %s13 = scalar_lea.sflag [#allocation4], 1
    %14 = vsyncpa %s13, 0
    loop: start=0, step=1, limit=4
    $region2: #{tpu_custom_call.1} parent=1 // loop_pre_header
      _
    $region3: #{tpu_custom_call.1} parent=1 // loop_header
      %s16 = sphi 0, %s20
      %p17 = scmp.ge.s32.totalorder %s16, 4
      %s26 = sphi 0, %s28
      %s29 = sphi 0, %s26
      %s30 = sphi 0, %s29
      %s46 = sphi 0, %s30
      %s50 = sphi 0, %s50
      %s52 = sphi 0, %s50
      %s53 = sphi 0, %s52
      %s67 = sphi 0, %s53
      %s71 = sphi 0, %s71
      %s73 = sphi 0, %s71
      %s74 = sphi 0, %s73
      %s88 = sphi 0, %s74
      %s94 = sphi 0, %s96
      %s97 = sphi 0, %s94
      %s98 = sphi 0, %s97
      %s114 = sphi 0, %s98
    $region4: #{tpu_custom_call.1} parent=1 // loop_header_branch
      %19 = sbr.rel (%p17) target = $region8
    $region5: #{tpu_custom_call.1} parent=1 // loop_body
      %s21 = ssub.s32 %s16, 1
      %s22 = ssub.s32 %s16, 2
      %s23 = sadd.s32 %s16, 1
      %s24 = ssub.s32 %s16, %s23
      %p25 = scmp.eq.s32.totalorder %s24, 0
      %s27 = sadd.s32 %s26, 1
      %s28 = scalar_select %p25, %s26, %s27
      %p31 = pneg %p25
      %p32 = scmp.eq.s32.totalorder %s16, 1
      %p33 = por %p31, %p32
      %p34 = scmp.ne.s32.totalorder %s26, %s29
      %p35 = scmp.eq.s32.totalorder %s16, 0
      %p36 = por %p34, %p35
      %p37 = scmp.ne.s32.totalorder %s26, %s29
      %p38 = scmp.eq.s32.totalorder %s21, 1
      %p39 = por %p37, %p38
      %p40 = scmp.ne.s32.totalorder %s29, %s30
      %p41 = scmp.eq.s32.totalorder %s21, 0
      %p42 = por %p40, %p41
      %p43 = scmp.ne.s32.totalorder %s29, %s30
      %p44 = scmp.eq.s32.totalorder %s22, 1
      %p45 = por %p43, %p44
      %p47 = scmp.ne.s32.totalorder %s30, %s46
      %p48 = scmp.eq.s32.totalorder %s22, 0
      %p49 = por %p47, %p48
      %s51 = sadd.s32 %s50, 1
      %p54 = scmp.eq.s32.totalorder %s16, 1
      %p55 = scmp.ne.s32.totalorder %s50, %s52
      %p56 = scmp.eq.s32.totalorder %s16, 0
      %p57 = por %p55, %p56
      %p58 = scmp.ne.s32.totalorder %s50, %s52
      %p59 = scmp.eq.s32.totalorder %s21, 1
      %p60 = por %p58, %p59
      %p61 = scmp.ne.s32.totalorder %s52, %s53
      %p62 = scmp.eq.s32.totalorder %s21, 0
      %p63 = por %p61, %p62
      %p64 = scmp.ne.s32.totalorder %s52, %s53
      %p65 = scmp.eq.s32.totalorder %s22, 1
      %p66 = por %p64, %p65
      %p68 = scmp.ne.s32.totalorder %s53, %s67
      %p69 = scmp.eq.s32.totalorder %s22, 0
      %p70 = por %p68, %p69
      %s72 = sadd.s32 %s71, 1
      %p75 = scmp.eq.s32.totalorder %s16, 1
      %p76 = scmp.ne.s32.totalorder %s71, %s73
      %p77 = scmp.eq.s32.totalorder %s16, 0
      %p78 = por %p76, %p77
      %p79 = scmp.ne.s32.totalorder %s71, %s73
      %p80 = scmp.eq.s32.totalorder %s21, 1
      %p81 = por %p79, %p80
      %p82 = scmp.ne.s32.totalorder %s73, %s74
      %p83 = scmp.eq.s32.totalorder %s21, 0
      %p84 = por %p82, %p83
      %p85 = scmp.ne.s32.totalorder %s73, %s74
      %p86 = scmp.eq.s32.totalorder %s22, 1
      %p87 = por %p85, %p86
      %p89 = scmp.ne.s32.totalorder %s74, %s88
      %p90 = scmp.eq.s32.totalorder %s22, 0
      %p91 = por %p89, %p90
      %s92 = ssub.s32 %s16, %s23
      %p93 = scmp.eq.s32.totalorder %s92, 0
      %s95 = sadd.s32 %s94, 1
      %s96 = scalar_select %p93, %s94, %s95
      %p99 = pneg %p93
      %p100 = scmp.eq.s32.totalorder %s16, 1
      %p101 = por %p99, %p100
      %p102 = scmp.ne.s32.totalorder %s94, %s97
      %p103 = scmp.eq.s32.totalorder %s16, 0
      %p104 = por %p102, %p103
      %p105 = scmp.ne.s32.totalorder %s94, %s97
      %p106 = scmp.eq.s32.totalorder %s21, 1
      %p107 = por %p105, %p106
      %p108 = scmp.ne.s32.totalorder %s97, %s98
      %p109 = scmp.eq.s32.totalorder %s21, 0
      %p110 = por %p108, %p109
      %p111 = scmp.ne.s32.totalorder %s97, %s98
      %p112 = scmp.eq.s32.totalorder %s22, 1
      %p113 = por %p111, %p112
      %p115 = scmp.ne.s32.totalorder %s98, %s114
      %p116 = scmp.eq.s32.totalorder %s22, 0
      %p117 = por %p115, %p116
      %p118 = scmp.le.s32.totalorder 1, %s16
      %p119 = scmp.lt.s32.totalorder %s16, 3
      %p120 = pnand %p118, %p119
      %p121 = pneg %p120
      // Predicated region
      $region9: #{tpu_custom_call.1} parent=5 // pred_check
        _
      $region10: #{tpu_custom_call.1} parent=5 // pred_check_branch
        %123 = sbr.rel (%p120) target = $region12
      $region11: #{tpu_custom_call.1} parent=5 // pred_region
        %s124 = ssub.s32 %s16, 1
        // Predicated region
        $region13: #{tpu_custom_call.1} parent=11 // pred_check
          %p125 = pneg %p63
        $region14: #{tpu_custom_call.1} parent=11 // pred_check_branch
          %127 = sbr.rel (%p125) target = $region16
        $region15: #{tpu_custom_call.1} parent=11 // pred_region
          %s129 = ssub.s32 64, 64
          %130 = vsyncadd [#allocation6], %s129
          %s132 = sshll.u32 [#allocation5], 4
          %s133 = int_to_ptr.vmem [resolvable:$true] %s132
          %135 = dma.hbm_to_vmem [thread:$0]  %s1, 64, %s133, [#allocation6]
        $region16: #{tpu_custom_call.1} parent=11 // pred_fallthru
          _
        // Predicated region
        $region17: #{tpu_custom_call.1} parent=11 // pred_check
          %p136 = pneg %p84
        $region18: #{tpu_custom_call.1} parent=11 // pred_check_branch
          %138 = sbr.rel (%p136) target = $region20
        $region19: #{tpu_custom_call.1} parent=11 // pred_region
          _
        $region20: #{tpu_custom_call.1} parent=11 // pred_fallthru
          _
      $region12: #{tpu_custom_call.1} parent=5 // pred_fallthru
        _
      %p139 = scmp.lt.s32.totalorder %s16, 2
      // Predicated region
      $region21: #{tpu_custom_call.1} parent=5 // pred_check
        %p140 = pneg %p139
      $region22: #{tpu_custom_call.1} parent=5 // pred_check_branch
        %142 = sbr.rel (%p140) target = $region24
      $region23: #{tpu_custom_call.1} parent=5 // pred_region
        // Predicated region
        $region25: #{tpu_custom_call.1} parent=23 // pred_check
          %p143 = pneg %p36
        $region26: #{tpu_custom_call.1} parent=23 // pred_check_branch
          %145 = sbr.rel (%p143) target = $region28
        $region27: #{tpu_custom_call.1} parent=23 // pred_region
          %s146 = sand.u32 %s26, 1
          %s147 = scalar_lea.sflag [#allocation3], %s146
          %s148 = sand.u32 %s26, 1
          %s149 = smul.addr %s148, 8
          %s150 = scalar_lea.vmem [#allocation2], %s149
          %s152 = ssub.s32 128, 128
          %153 = vsyncadd %s147, %s152
          %s154 = smul.addr %s16, 2
          %s155 = smul.addr %s154, 64
          %s156 = scalar_lea.hbm %s0, %s155
          %s158 = sshll.u32 %s150, 4
          %s159 = int_to_ptr.vmem [resolvable:$true] %s158
          %161 = dma.hbm_to_vmem [thread:$0]  %s156, 128, %s159, %s147
        $region28: #{tpu_custom_call.1} parent=23 // pred_fallthru
          _
      $region24: #{tpu_custom_call.1} parent=5 // pred_fallthru
        _
      %p162 = scmp.le.s32.totalorder 1, %s16
      %p163 = scmp.lt.s32.totalorder %s16, 3
      %p164 = pnand %p162, %p163
      %p165 = pneg %p164
      // Predicated region
      $region29: #{tpu_custom_call.1} parent=5 // pred_check
        _
      $region30: #{tpu_custom_call.1} parent=5 // pred_check_branch
        %167 = sbr.rel (%p164) target = $region32
      $region31: #{tpu_custom_call.1} parent=5 // pred_region
        %s168 = ssub.s32 %s16, 1
        %s169 = sand.u32 %s29, 1
        %s170 = scalar_lea.sflag [#allocation3], %s169
        %s171 = sand.u32 %s29, 1
        %s172 = smul.addr %s171, 8
        %s173 = scalar_lea.vmem [#allocation2], %s172
        // Predicated region
        $region33: #{tpu_custom_call.1} parent=31 // pred_check
          %p174 = pneg %p42
        $region34: #{tpu_custom_call.1} parent=31 // pred_check_branch
          %176 = sbr.rel (%p174) target = $region36
        $region35: #{tpu_custom_call.1} parent=31 // pred_region
          %177 = dma.done %s170, 128
        $region36: #{tpu_custom_call.1} parent=31 // pred_fallthru
          _
        // Predicated region
        $region37: #{tpu_custom_call.1} parent=31 // pred_check
          %p178 = pneg %p63
        $region38: #{tpu_custom_call.1} parent=31 // pred_check_branch
          %180 = sbr.rel (%p178) target = $region40
        $region39: #{tpu_custom_call.1} parent=31 // pred_region
          %181 = dma.done [#allocation6], 64
        $region40: #{tpu_custom_call.1} parent=31 // pred_fallthru
          _
        %s182 = sand.u32 %s29, 1
        %s183 = scalar_lea.sflag [#allocation3], %s182
        %s184 = sand.u32 %s29, 1
        %s185 = smul.addr %s184, 8
        %s186 = scalar_lea.vmem [#allocation2], %s185
        %p187 = pneg %p42
        %p188 = pneg %p39
        %p189 = pneg %p63
        %p190 = pneg %p60
        %p191 = pneg %p84
        %p192 = pneg %p81
        %p193 = pneg %p110
        %p194 = pneg %p107
        %s195 = sand.u32 %s97, 1
        %s196 = scalar_lea.sflag [#allocation4], %s195
        %s197 = sand.u32 %s97, 1
        %s198 = smul.addr %s197, 8
        %s199 = scalar_lea.vmem [#allocation7], %s198
        %v200 = vld [vmem:[%s173] sm:$0xff]
        %v202 = vcombine.high %v200, %v200
        %vm204 = vcmask 1043456
        %v205 = vsel %vm204, %v200, 0.0
        %v206 = vsel %vm204, %v202, 0.0
        %v207 = vadd.f32 %v205, %v206
        %208 = vadd.xlane.f32.xlu0 %v207
        %v209 = vpop.xlane.xlu0 %208
        %v210 = vmul.f32 %v209, 0.00390625
        %v211 = vld [vmem:[#allocation5] sm:$0xf]
        %v212 = vld [vmem:[%s2] sm:$0x1]
        %v214 = vlaneseq
        %v215 = vand.u32 %v214, 127
        %v216 = vlaneseq
        %v217 = vshrl.u32 %v216, 7
        %v218 = vsub.s32 %v215, %v217
        %v219 = vrot.slane %v210, %v218
        %vm220 = vcmask 31744
        %v221 = vsel %vm220, %v219, 0
        %v224 = vsel %vm204, %v211, 0
        %226 = vmatprep.subr.mxu0 0.0
        %227 = vmatpush1.msra.mxu0 %v224
        %228 = vmatprep.subr.mxu0 0.0
        %229 = vmatpush1.msra.mxu0 0.0
        %230 = vmatprep.subr.mxu0 0.0
        %231 = vmatpush1.msra.mxu0 0.0
        %232 = vmatprep.subr.mxu0 0.0
        %233 = vmatpush1.msra.mxu0 0.0
        %234 = vmatprep.subr.mxu0 0.0
        %235 = vmatpush1.msra.mxu0 0.0
        %236 = vmatprep.subr.mxu0 0.0
        %237 = vmatpush1.msra.mxu0 0.0
        %238 = vmatprep.subr.mxu0 0.0
        %239 = vmatpush1.msra.mxu0 0.0
        %240 = vmatprep.subr.mxu0 0.0
        %241 = vmatpush1.msra.mxu0 0.0
        %242 = vmatprep.subr.mxu0 0.0
        %243 = vmatpush1.msra.mxu0 0.0
        %244 = vmatprep.subr.mxu0 0.0
        %245 = vmatpush1.msra.mxu0 0.0
        %246 = vmatprep.subr.mxu0 0.0
        %247 = vmatpush1.msra.mxu0 0.0
        %248 = vmatprep.subr.mxu0 0.0
        %249 = vmatpush1.msra.mxu0 0.0
        %250 = vmatprep.subr.mxu0 0.0
        %251 = vmatpush1.msra.mxu0 0.0
        %252 = vmatprep.subr.mxu0 0.0
        %253 = vmatpush1.msra.mxu0 0.0
        %254 = vmatprep.subr.mxu0 0.0
        %255 = vmatpush1.msra.mxu0 0.0
        %256 = vmatprep.subr.mxu0 0.0
        %257 = vmatpush1.msra.mxu0 0.0
        %258 = vmatprep.subr.mxu0 0.0
        %259 = vmatpush1.msra.mxu0 0.0
        %260 = vmatprep.subr.mxu0 0.0
        %261 = vmatpush1.msra.mxu0 0.0
        %262 = vmatprep.subr.mxu0 0.0
        %263 = vmatpush1.msra.mxu0 0.0
        %264 = vmatprep.subr.mxu0 0.0
        %265 = vmatpush1.msra.mxu0 0.0
        %266 = vmatprep.subr.mxu0 0.0
        %267 = vmatpush1.msra.mxu0 0.0
        %268 = vmatprep.subr.mxu0 0.0
        %269 = vmatpush1.msra.mxu0 0.0
        %270 = vmatprep.subr.mxu0 0.0
        %271 = vmatpush1.msra.mxu0 0.0
        %272 = vmatprep.subr.mxu0 0.0
        %273 = vmatpush1.msra.mxu0 0.0
        %274 = vmatprep.subr.mxu0 0.0
        %275 = vmatpush1.msra.mxu0 0.0
        %276 = vmatprep.subr.mxu0 0.0
        %277 = vmatpush1.msra.mxu0 0.0
        %278 = vmatprep.subr.mxu0 0.0
        %279 = vmatpush1.msra.mxu0 0.0
        %280 = vmatprep.subr.mxu0 0.0
        %281 = vmatpush1.msra.mxu0 0.0
        %282 = vmatprep.subr.mxu0 0.0
        %283 = vmatpush1.msra.mxu0 0.0
        %284 = vmatprep.subr.mxu0 0.0
        %285 = vmatpush1.msra.mxu0 0.0
        %286 = vmatprep.subr.mxu0 0.0
        %287 = vmatpush1.msra.mxu0 0.0
        %288 = vmatprep.subr.mxu0 0.0
        %289 = vmatpush1.msra.mxu0 0.0
        %290 = vmatprep.mubr.f32.mxu0 0.0
        %291 = vmatmul.mubr.f32.gmra.mrb[0].mxu0 %v221
        %v292 = vpop.f32.mrb[0].mxu0
        %v293 = vadd.f32 %v212, %v292
        %v294 = vpop.f32.mrb[0].mxu0
        %295 = vdwg.mxu0
        %v297 = vmul.f32 %v293, %v219
        %v298 = vxor.u32 %v297, 2147483648
        %v299 = vmul.f32 %v298, 1.442695
        %v300 = vpow.pop %v299
        %v301 = vadd.f32 %v300, 1.0
        %v302 = vrcp.pop %v301
        %v303 = vmul.f32 1.0, %v302
        %v304 = vlaneseq
        %v305 = vshrl.u32 %v304, 7
        %v306 = vsub.s32 0, %v305
        %v307 = vrot.slane %v303, %v306
        %309 = vbcast.lane.b32.xlu0 %v307, 256
        %v310 = vpop.permute.xlu0 %309
        %v313 = vunpack.c.l.s4 839922192
        %v314 = vunpack.c.0.s8 %v313
        %v315 = vlaneseq
        %v316 = vshrl.u32 %v315, 7
        %v317 = vsub.s32 %v314, %v316
        %v318 = vrot.slane %v310, %v317
        %v320 = vmul.f32 %v200, %v318
        %321 = vst [vmem:[%s199] sm:$0xff] %v320
        %s322 = sand.u32 %s97, 1
        %s323 = scalar_lea.sflag [#allocation4], %s322
        %s324 = sand.u32 %s97, 1
        %s325 = smul.addr %s324, 8
        %s326 = scalar_lea.vmem [#allocation7], %s325
        // Predicated region
        $region41: #{tpu_custom_call.1} parent=31 // pred_check
          %p327 = pneg %p107
        $region42: #{tpu_custom_call.1} parent=31 // pred_check_branch
          %329 = sbr.rel (%p327) target = $region44
        $region43: #{tpu_custom_call.1} parent=31 // pred_region
          %s331 = ssub.s32 128, 128
          %332 = vsyncadd %s323, %s331
          %s333 = smul.addr %s21, 2
          %s334 = smul.addr %s333, 64
          %s335 = scalar_lea.hbm %s3, %s334
          %s337 = sshll.u32 %s326, 4
          %s338 = int_to_ptr.vmem [resolvable:$true] %s337
          %340 = dma.vmem_to_hbm [thread:$0]  %s338, 128, %s335, %s323
        $region44: #{tpu_custom_call.1} parent=31 // pred_fallthru
          _
      $region32: #{tpu_custom_call.1} parent=5 // pred_fallthru
        _
      %p341 = scmp.le.s32.totalorder 2, %s16
      // Predicated region
      $region45: #{tpu_custom_call.1} parent=5 // pred_check
        %p342 = pneg %p341
      $region46: #{tpu_custom_call.1} parent=5 // pred_check_branch
        %344 = sbr.rel (%p342) target = $region48
      $region47: #{tpu_custom_call.1} parent=5 // pred_region
        %s345 = ssub.s32 %s16, 2
        // Predicated region
        $region49: #{tpu_custom_call.1} parent=47 // pred_check
          %p346 = pneg %p113
        $region50: #{tpu_custom_call.1} parent=47 // pred_check_branch
          %348 = sbr.rel (%p346) target = $region52
        $region51: #{tpu_custom_call.1} parent=47 // pred_region
          %s349 = sand.u32 %s98, 1
          %s350 = scalar_lea.sflag [#allocation4], %s349
          %s351 = sand.u32 %s98, 1
          %s352 = smul.addr %s351, 8
          %s353 = scalar_lea.vmem [#allocation7], %s352
          %354 = dma.done %s350, 128
        $region52: #{tpu_custom_call.1} parent=47 // pred_fallthru
          _
      $region48: #{tpu_custom_call.1} parent=5 // pred_fallthru
        _
    $region6: #{tpu_custom_call.1} parent=1 // loop_footer
      %s20 = sadd.s32 1, %s16
    $region7: #{tpu_custom_call.1} parent=1 // loop_footer_branch
      %15 = sbr.rel target = $region3
    $region8: #{tpu_custom_call.1} parent=1 // loop_exit
      _
    %355 = vsyncpa [#allocation3], 1
    %s356 = scalar_lea.sflag [#allocation3], 1
    %357 = vsyncpa %s356, 1
    %358 = vsyncpa [#allocation6], 1
    %359 = vsyncpa [#allocation4], 1
    %s360 = scalar_lea.sflag [#allocation4], 1
    %361 = vsyncpa %s360, 1

</llo_original>
